<compile_context>
chip_gen: v7x
topology: tpu7x:2x2x1
jax: 0.10.0
libtpu: 0.0.40
codegen_flags: <defaults>
</compile_context>

<pallas_src>
import functools

import numpy as np
import jax
import jax.numpy as jnp
from jax.experimental import pallas as pl
from jax.experimental.pallas import tpu as pltpu

_LANE = 128             # vreg lane width (last dim)
_SUBLANE = 8            # vreg sublane count (second-to-last dim, f32)
_MAX_BATCH_TILE = 256   # fills the 2x256^2 MXU on v6e/v7x (2 passes on v5e)
_VMEM_GUARD_BYTES = 12 * 1024 * 1024


def _round_up(n, m):
    return ((n + m - 1) // m) * m


def _fused_mlp_kernel(x_ref, *refs, n_layers):
    """refs = (w0, ..., w{L-1}, b_all, out).  Activations never leave VMEM."""
    o_ref = refs[-1]
    b_ref = refs[-2]          # (n_layers, MAXW) f32, zero-padded per row
    w_refs = refs[:-2]

    h = x_ref[...]
    for i in range(n_layers):
        w = w_refs[i][...]
        fo = w.shape[1]
        # MXU matmul with f32 accumulation (inputs bf16 or f32).
        h = jnp.dot(h.astype(w.dtype), w, preferred_element_type=jnp.float32)
        h = h + b_ref[i:i + 1, :fo]
        if i != n_layers - 1:
            h = jnp.maximum(h, 0.0)   # ReLU; dropout (eval mode) == identity
    o_ref[...] = h.astype(o_ref.dtype)


def fused_mlp_pallas(x_flat, padded_ws, b_all, num_classes,
                     out_dtype=jnp.float32):
    """y = output_fc(relu(... relu(input_fc(x)) ...)) in one pallas_call."""
    B, IN = x_flat.shape
    n_layers = len(padded_ws)
    OUT_pad = padded_ws[-1].shape[1]
    compute_dtype = padded_ws[0].dtype

    # Batch tiling: single full-array block for small B (no padding, no extra
    # HBM pass), 256-row tiles (MXU-filling) + parallel grid for large B.
    if B <= _MAX_BATCH_TILE:
        tb, b_pad = B, B
    else:
        tb = _MAX_BATCH_TILE
        b_pad = _round_up(B, tb)
    nb = b_pad // tb

    x_in = x_flat.astype(compute_dtype)
    if b_pad != B:
        x_in = jnp.pad(x_in, ((0, b_pad - B), (0, 0)))

    inputs = [x_in]
    in_specs = [pl.BlockSpec((tb, IN), lambda i: (i, 0))]
    for w in padded_ws:
        inputs.append(w)
        in_specs.append(pl.BlockSpec(w.shape, lambda i: (0, 0)))
    inputs.append(b_all)
    in_specs.append(pl.BlockSpec(b_all.shape, lambda i: (0, 0)))

    # Advisory cost estimate (whole call).
    flops = sum(2 * b_pad * w.shape[0] * w.shape[1] for w in padded_ws)
    bytes_accessed = (
        b_pad * IN * np.dtype(compute_dtype).itemsize
        + sum(int(w.size) * np.dtype(w.dtype).itemsize for w in padded_ws)
        + int(b_all.size) * np.dtype(b_all.dtype).itemsize
        + b_pad * OUT_pad * np.dtype(out_dtype).itemsize)

    # VMEM-footprint guard (double-buffered, conservative).
    resident = (2 * tb * IN * np.dtype(compute_dtype).itemsize
                + 2 * tb * OUT_pad * np.dtype(out_dtype).itemsize
                + 2 * sum(int(w.size) * np.dtype(w.dtype).itemsize
                          for w in padded_ws)
                + 2 * int(b_all.size) * np.dtype(b_all.dtype).itemsize)
    compiler_kwargs = dict(dimension_semantics=("parallel",))
    if resident > _VMEM_GUARD_BYTES:
        # Raise the scoped limit (defaults: 16 MiB v5e / 32 MiB v6e,v7x) with
        # headroom; cap below v7x's 64 MiB physical VMEM.
        compiler_kwargs["vmem_limit_bytes"] = min(int(resident * 1.25),
                                                  60 * 1024 * 1024)

    kernel = functools.partial(_fused_mlp_kernel, n_layers=n_layers)
    out_p = pl.pallas_call(
        kernel,
        out_shape=jax.ShapeDtypeStruct((b_pad, OUT_pad), out_dtype),
        grid=(nb,),
        in_specs=in_specs,
        out_specs=pl.BlockSpec((tb, OUT_pad), lambda i: (i, 0)),
        compiler_params=pltpu.CompilerParams(**compiler_kwargs),
        cost_estimate=pl.CostEstimate(flops=flops, transcendentals=0,
                                      bytes_accessed=bytes_accessed),
    )(*inputs)

    if b_pad != B or OUT_pad != num_classes:
        out_p = out_p[:B, :num_classes]
    return out_p


def init_mlp_params(key, input_dim, hidden_neurons, num_classes):
    """PyTorch-Linear-like uniform init; weights stored as (in, out)."""
    dims = [input_dim] + list(hidden_neurons) + [num_classes]
    params = []
    for i in range(len(dims) - 1):
        fan_in, fan_out = dims[i], dims[i + 1]
        key, kw, kb = jax.random.split(key, 3)
        bound = 1.0 / jnp.sqrt(fan_in)
        w = jax.random.uniform(kw, (fan_in, fan_out), jnp.float32, -bound, bound)
        b = jax.random.uniform(kb, (fan_out,), jnp.float32, -bound, bound)
        params.append((w, b))
    return params


def prepare_padded_params(params, param_dtype=jnp.bfloat16):
    """One-time prep.

    * Weights keep their true hidden dims (full-array blocks are legal); only
      the final layer's output dim is zero-padded to a multiple of 128 so the
      kernel's output store is lane-dense.  Zero columns + zero bias keep the
      math exact.
    * Biases are packed into a single (n_layers, MAXW) f32 array (one DMA).
    * param_dtype=jnp.bfloat16 (default) halves weight/activation HBM bytes;
      accumulation stays f32 inside the kernel.
    """
    n = len(params)
    padded_ws = []
    out_widths = []
    for idx, (w, _) in enumerate(params):
        fi, fo = w.shape
        fo_p = _round_up(fo, _LANE) if idx == n - 1 else fo
        w_p = jnp.zeros((fi, fo_p), param_dtype).at[:, :fo].set(
            w.astype(param_dtype))
        padded_ws.append(w_p)
        out_widths.append(fo_p)

    maxw = _round_up(max(out_widths), _LANE)
    b_all = jnp.zeros((n, maxw), jnp.float32)
    for idx, (_, b) in enumerate(params):
        b_all = b_all.at[idx, :b.shape[0]].set(b.astype(jnp.float32))
    return padded_ws, b_all


@functools.partial(jax.jit, static_argnums=(3,))
def mlp_forward(x_nchw, padded_ws, b_all, num_classes):
    # flatten: x.view(x.size(0), -1)
    B = x_nchw.shape[0]
    x = x_nchw.reshape(B, -1)
    return fused_mlp_pallas(x, padded_ws, b_all, num_classes)


def mlp_reference(x_nchw, params, compute_dtype=jnp.float32):
    """Pure-JAX reference mirroring the kernel's cast/accumulate pattern."""
    B = x_nchw.shape[0]
    h = x_nchw.reshape(B, -1).astype(compute_dtype)
    n = len(params)
    for i, (w, b) in enumerate(params):
        h = jnp.dot(h.astype(compute_dtype), w.astype(compute_dtype),
                    preferred_element_type=jnp.float32)
        h = h + b.astype(jnp.float32)
        if i != n - 1:
            h = jnp.maximum(h, 0.0)
            h = h.astype(compute_dtype)
    return h


if __name__ == "__main__":
    key = jax.random.PRNGKey(0)
    k_x, k_p = jax.random.split(key)

    # small shapes consistent with the module: batch=2, C=4, H=W=16
    B, C, H, W = 2, 4, 16, 16
    input_dim = C * H * W          # 1024
    hidden_neurons = [32, 32]
    num_classes = 8

    x = jax.random.normal(k_x, (B, C, H, W), jnp.float32)
    params = init_mlp_params(k_p, input_dim, hidden_neurons, num_classes)

    # --- exact f32 path: verifies reference semantics tightly --------------
    ws_f32, b_all_f32 = prepare_padded_params(params, param_dtype=jnp.float32)
    out_f32 = jax.block_until_ready(mlp_forward(x, ws_f32, b_all_f32,
                                                num_classes))
    ref_f32 = mlp_reference(x, params, compute_dtype=jnp.float32)
    assert out_f32.shape == (B, num_classes), out_f32.shape
    assert jnp.allclose(out_f32, ref_f32, atol=1e-4, rtol=1e-4), (
        "f32 path mismatch: max abs err "
        f"{float(jnp.max(jnp.abs(out_f32 - ref_f32)))}"
    )

    # --- default bf16 path: perf default (f32 accumulation) ----------------
    ws_bf16, b_all_bf16 = prepare_padded_params(params)  # bf16 default
    out_bf16 = jax.block_until_ready(mlp_forward(x, ws_bf16, b_all_bf16,
                                                 num_classes))
    ref_bf16 = mlp_reference(x, params, compute_dtype=jnp.bfloat16)
    assert out_bf16.shape == (B, num_classes), out_bf16.shape
    assert jnp.allclose(out_bf16, ref_bf16, atol=1e-2, rtol=1e-2), (
        "bf16 path mismatch vs bf16 reference: max abs err "
        f"{float(jnp.max(jnp.abs(out_bf16 - ref_bf16)))}"
    )
    assert jnp.allclose(out_bf16, ref_f32, atol=5e-2, rtol=5e-2), (
        "bf16 path drifted from f32 semantics: max abs err "
        f"{float(jnp.max(jnp.abs(out_bf16 - ref_f32)))}"
    )

    print("KERNEL_OK")
</pallas_src>

<mosaic_0001>
module attributes {stable_mosaic.version = 11 : i64} {
  func.func @_fused_mlp_kernel(%arg0: i32, %arg1: memref<2x1024xf32, #tpu.memory_space<vmem>>, %arg2: memref<1024x32xf32, #tpu.memory_space<vmem>>, %arg3: memref<32x32xf32, #tpu.memory_space<vmem>>, %arg4: memref<32x128xf32, #tpu.memory_space<vmem>>, %arg5: memref<3x128xf32, #tpu.memory_space<vmem>>, %arg6: memref<2x128xf32, #tpu.memory_space<vmem>>) attributes {dimension_semantics = [#tpu.dimension_semantics<parallel>], iteration_bounds = array<i64: 1>, scalar_prefetch = 0 : i64, scratch_operands = 0 : i64, tpu.core_type = #tpu.core_type<tc>, window_params = [{transform_indices = @transform_0, window_bounds = array<i64: 2, 1024>}, {pipeline_mode = #tpu.pipeline_mode<synchronous>, transform_indices = @transform_1, window_bounds = array<i64: 1024, 32>}, {pipeline_mode = #tpu.pipeline_mode<synchronous>, transform_indices = @transform_2, window_bounds = array<i64: 32, 32>}, {pipeline_mode = #tpu.pipeline_mode<synchronous>, transform_indices = @transform_3, window_bounds = array<i64: 32, 128>}, {pipeline_mode = #tpu.pipeline_mode<synchronous>, transform_indices = @transform_4, window_bounds = array<i64: 3, 128>}, {transform_indices = @transform_5, window_bounds = array<i64: 2, 128>}]} {
    %c0 = arith.constant 0 : index
    %c0_0 = arith.constant 0 : index
    %0 = vector.load %arg1[%c0, %c0_0] : memref<2x1024xf32, #tpu.memory_space<vmem>>, vector<2x1024xf32>
    %c0_1 = arith.constant 0 : index
    %c0_2 = arith.constant 0 : index
    %1 = vector.load %arg2[%c0_1, %c0_2] : memref<1024x32xf32, #tpu.memory_space<vmem>>, vector<1024x32xf32>
    %cst = arith.constant dense<0.000000e+00> : vector<2x32xf32>
    %2 = tpu.matmul %0, %1, %cst {dimension_numbers = #tpu.dot_dimension_numbers<[1], [0], [0], [1], [0, 0, 1, 1], [], []>} : vector<2x1024xf32>, vector<1024x32xf32>, vector<2x32xf32> -> vector<2x32xf32>
    %c0_3 = arith.constant 0 : index
    %c0_4 = arith.constant 0 : index
    %3 = vector.load %arg5[%c0_3, %c0_4] : memref<3x128xf32, #tpu.memory_space<vmem>>, vector<1x32xf32>
    %4 = vector.broadcast %3 : vector<1x32xf32> to vector<2x32xf32>
    %5 = arith.addf %2, %4 : vector<2x32xf32>
    %cst_5 = arith.constant 0.000000e+00 : f32
    %6 = vector.broadcast %cst_5 : f32 to vector<2x32xf32>
    %7 = arith.maximumf %5, %6 : vector<2x32xf32>
    %c0_6 = arith.constant 0 : index
    %c0_7 = arith.constant 0 : index
    %8 = vector.load %arg3[%c0_6, %c0_7] : memref<32x32xf32, #tpu.memory_space<vmem>>, vector<32x32xf32>
    %cst_8 = arith.constant dense<0.000000e+00> : vector<2x32xf32>
    %9 = tpu.matmul %7, %8, %cst_8 {dimension_numbers = #tpu.dot_dimension_numbers<[1], [0], [0], [1], [0, 0, 1, 1], [], []>} : vector<2x32xf32>, vector<32x32xf32>, vector<2x32xf32> -> vector<2x32xf32>
    %c1 = arith.constant 1 : index
    %c0_9 = arith.constant 0 : index
    %10 = vector.load %arg5[%c1, %c0_9] : memref<3x128xf32, #tpu.memory_space<vmem>>, vector<1x32xf32>
    %11 = vector.broadcast %10 : vector<1x32xf32> to vector<2x32xf32>
    %12 = arith.addf %9, %11 : vector<2x32xf32>
    %cst_10 = arith.constant 0.000000e+00 : f32
    %13 = vector.broadcast %cst_10 : f32 to vector<2x32xf32>
    %14 = arith.maximumf %12, %13 : vector<2x32xf32>
    %c0_11 = arith.constant 0 : index
    %c0_12 = arith.constant 0 : index
    %15 = vector.load %arg4[%c0_11, %c0_12] : memref<32x128xf32, #tpu.memory_space<vmem>>, vector<32x128xf32>
    %cst_13 = arith.constant dense<0.000000e+00> : vector<2x128xf32>
    %16 = tpu.matmul %14, %15, %cst_13 {dimension_numbers = #tpu.dot_dimension_numbers<[1], [0], [0], [1], [0, 0, 1, 1], [], []>} : vector<2x32xf32>, vector<32x128xf32>, vector<2x128xf32> -> vector<2x128xf32>
    %c2 = arith.constant 2 : index
    %c0_14 = arith.constant 0 : index
    %17 = vector.load %arg5[%c2, %c0_14] : memref<3x128xf32, #tpu.memory_space<vmem>>, vector<1x128xf32>
    %18 = vector.broadcast %17 : vector<1x128xf32> to vector<2x128xf32>
    %19 = arith.addf %16, %18 : vector<2x128xf32>
    %c0_15 = arith.constant 0 : index
    %c0_16 = arith.constant 0 : index
    %20 = vector.load %arg6[%c0_15, %c0_16] : memref<2x128xf32, #tpu.memory_space<vmem>>, vector<2x128xf32>
    tpu.vector_store %arg6[%c0_15, %c0_16], %19 {strides = array<i32>} : memref<2x128xf32, #tpu.memory_space<vmem>>, vector<2x128xf32>,
    return
  }
  func.func @transform_0(%arg0: i32) -> (i32, i32) {
    %c0_i32 = arith.constant 0 : i32
    %c0_i32_0 = arith.constant 0 : i32
    return %arg0, %c0_i32 : i32, i32
  }
  func.func @transform_1(%arg0: i32) -> (i32, i32) {
    %c0_i32 = arith.constant 0 : i32
    %c0_i32_0 = arith.constant 0 : i32
    %c0_i32_1 = arith.constant 0 : i32
    return %c0_i32, %c0_i32_0 : i32, i32
  }
  func.func @transform_2(%arg0: i32) -> (i32, i32) {
    %c0_i32 = arith.constant 0 : i32
    %c0_i32_0 = arith.constant 0 : i32
    %c0_i32_1 = arith.constant 0 : i32
    return %c0_i32, %c0_i32_0 : i32, i32
  }
  func.func @transform_3(%arg0: i32) -> (i32, i32) {
    %c0_i32 = arith.constant 0 : i32
    %c0_i32_0 = arith.constant 0 : i32
    %c0_i32_1 = arith.constant 0 : i32
    return %c0_i32, %c0_i32_0 : i32, i32
  }
  func.func @transform_4(%arg0: i32) -> (i32, i32) {
    %c0_i32 = arith.constant 0 : i32
    %c0_i32_0 = arith.constant 0 : i32
    %c0_i32_1 = arith.constant 0 : i32
    return %c0_i32, %c0_i32_0 : i32, i32
  }
  func.func @transform_5(%arg0: i32) -> (i32, i32) {
    %c0_i32 = arith.constant 0 : i32
    %c0_i32_0 = arith.constant 0 : i32
    return %arg0, %c0_i32 : i32, i32
  }
}

</mosaic_0001>

<llo_original>
// kernel: mlp_forward.1
$region0: #{mlp_forward.1}
  #allocation0 [shape = 'u32[]', space=smem, size = 0x4, offset = 0x4, fixed_abs, tag = 'smem constant byte address 0x4 - core index']
  #allocation1 [shape = 'u32[144,128]{1,0:T(1,128)}', space=vmem, size = 0x12000, scoped, tag = 'internal scratch']
  %s0 = inlined_call_operand.vmem [shape: f32[2,1024], index: 0, kind: input, shape index: {}]
  %s1 = inlined_call_operand.vmem [shape: f32[1024,32], index: 1, kind: input, shape index: {}]
  %s2 = inlined_call_operand.vmem [shape: f32[32,32], index: 2, kind: input, shape index: {}]
  %s3 = inlined_call_operand.vmem [shape: f32[32,128], index: 3, kind: input, shape index: {}]
  %s4 = inlined_call_operand.vmem [shape: f32[3,128], index: 4, kind: input, shape index: {}]
  %s5 = inlined_call_operand.hbm [shape: f32[2,128], index: 5, kind: output, shape index: {}]
  %s6 = sld [smem:[#allocation0]]
  $region30: #{mlp_forward.1} parent=0
    _
  %s8 = ssub.s32 1, %s6
  %s9 = scalar_select 0, %s8, %s6
  $region1: #{mlp_forward.1} parent=0
    #allocation2 [shape = 'u8[1024]{0}', space=vmem, size = 0x400, scoped, tag = 'output window, operand 0, single buffered']
    #allocation3 [shape = 's32[1]{0}', space=sflag, size = 0x4, scoped, tag = 'scoped memory for mlp_forward.1']
    %10 = vsyncpa [#allocation3], 0
    // Predicated region
    $region2: #{mlp_forward.1} parent=1 // pred_check
      _
    $region3: #{mlp_forward.1} parent=1 // pred_check_branch
      %12 = sbr.rel (0) target = $region5
    $region4: #{mlp_forward.1} parent=1 // pred_region
      _
    $region5: #{mlp_forward.1} parent=1 // pred_fallthru
      _
    // Predicated region
    $region6: #{mlp_forward.1} parent=1 // pred_check
      _
    $region7: #{mlp_forward.1} parent=1 // pred_check_branch
      %14 = sbr.rel (0) target = $region9
    $region8: #{mlp_forward.1} parent=1 // pred_region
      _
    $region9: #{mlp_forward.1} parent=1 // pred_fallthru
      _
    // Predicated region
    $region10: #{mlp_forward.1} parent=1 // pred_check
      _
    $region11: #{mlp_forward.1} parent=1 // pred_check_branch
      %16 = sbr.rel (0) target = $region13
    $region12: #{mlp_forward.1} parent=1 // pred_region
      _
    $region13: #{mlp_forward.1} parent=1 // pred_fallthru
      _
    // Predicated region
    $region14: #{mlp_forward.1} parent=1 // pred_check
      _
    $region15: #{mlp_forward.1} parent=1 // pred_check_branch
      %18 = sbr.rel (0) target = $region17
    $region16: #{mlp_forward.1} parent=1 // pred_region
      _
    $region17: #{mlp_forward.1} parent=1 // pred_fallthru
      _
    // Predicated region
    $region18: #{mlp_forward.1} parent=1 // pred_check
      _
    $region19: #{mlp_forward.1} parent=1 // pred_check_branch
      %20 = sbr.rel (0) target = $region21
    $region20: #{mlp_forward.1} parent=1 // pred_region
      _
    $region21: #{mlp_forward.1} parent=1 // pred_fallthru
      _
    %v21 = vld [vmem:[%s0] sm:$0xff]
    %v22 = vld [vmem:[%s0 + $0x8] sm:$0xff]
    %v23 = vld [vmem:[%s1] sm:$0xff]
    %v24 = vld [vmem:[%s1 + $0x8] sm:$0xff]
    %v25 = vld [vmem:[%s1 + $0x10] sm:$0xff]
    %v26 = vld [vmem:[%s1 + $0x18] sm:$0xff]
    %v27 = vld [vmem:[%s1 + $0x20] sm:$0xff]
    %v28 = vld [vmem:[%s1 + $0x28] sm:$0xff]
    %v29 = vld [vmem:[%s1 + $0x30] sm:$0xff]
    %v30 = vld [vmem:[%s1 + $0x38] sm:$0xff]
    %v31 = vld [vmem:[%s1 + $0x40] sm:$0xff]
    %v32 = vld [vmem:[%s1 + $0x48] sm:$0xff]
    %v33 = vld [vmem:[%s1 + $0x50] sm:$0xff]
    %v34 = vld [vmem:[%s1 + $0x58] sm:$0xff]
    %v35 = vld [vmem:[%s1 + $0x60] sm:$0xff]
    %v36 = vld [vmem:[%s1 + $0x68] sm:$0xff]
    %v37 = vld [vmem:[%s1 + $0x70] sm:$0xff]
    %v38 = vld [vmem:[%s1 + $0x78] sm:$0xff]
    %v39 = vld [vmem:[%s1 + $0x80] sm:$0xff]
    %v40 = vld [vmem:[%s1 + $0x88] sm:$0xff]
    %v41 = vld [vmem:[%s1 + $0x90] sm:$0xff]
    %v42 = vld [vmem:[%s1 + $0x98] sm:$0xff]
    %v43 = vld [vmem:[%s1 + $0xa0] sm:$0xff]
    %v44 = vld [vmem:[%s1 + $0xa8] sm:$0xff]
    %v45 = vld [vmem:[%s1 + $0xb0] sm:$0xff]
    %v46 = vld [vmem:[%s1 + $0xb8] sm:$0xff]
    %v47 = vld [vmem:[%s1 + $0xc0] sm:$0xff]
    %v48 = vld [vmem:[%s1 + $0xc8] sm:$0xff]
    %v49 = vld [vmem:[%s1 + $0xd0] sm:$0xff]
    %v50 = vld [vmem:[%s1 + $0xd8] sm:$0xff]
    %v51 = vld [vmem:[%s1 + $0xe0] sm:$0xff]
    %v52 = vld [vmem:[%s1 + $0xe8] sm:$0xff]
    %v53 = vld [vmem:[%s1 + $0xf0] sm:$0xff]
    %v54 = vld [vmem:[%s1 + $0xf8] sm:$0xff]
    %v55 = vld [vmem:[%s1 + $0x100] sm:$0xff]
    %v56 = vld [vmem:[%s1 + $0x108] sm:$0xff]
    %v57 = vld [vmem:[%s1 + $0x110] sm:$0xff]
    %v58 = vld [vmem:[%s1 + $0x118] sm:$0xff]
    %v59 = vld [vmem:[%s1 + $0x120] sm:$0xff]
    %v60 = vld [vmem:[%s1 + $0x128] sm:$0xff]
    %v61 = vld [vmem:[%s1 + $0x130] sm:$0xff]
    %v62 = vld [vmem:[%s1 + $0x138] sm:$0xff]
    %v63 = vld [vmem:[%s1 + $0x140] sm:$0xff]
    %v64 = vld [vmem:[%s1 + $0x148] sm:$0xff]
    %v65 = vld [vmem:[%s1 + $0x150] sm:$0xff]
    %v66 = vld [vmem:[%s1 + $0x158] sm:$0xff]
    %v67 = vld [vmem:[%s1 + $0x160] sm:$0xff]
    %v68 = vld [vmem:[%s1 + $0x168] sm:$0xff]
    %v69 = vld [vmem:[%s1 + $0x170] sm:$0xff]
    %v70 = vld [vmem:[%s1 + $0x178] sm:$0xff]
    %v71 = vld [vmem:[%s1 + $0x180] sm:$0xff]
    %v72 = vld [vmem:[%s1 + $0x188] sm:$0xff]
    %v73 = vld [vmem:[%s1 + $0x190] sm:$0xff]
    %v74 = vld [vmem:[%s1 + $0x198] sm:$0xff]
    %v75 = vld [vmem:[%s1 + $0x1a0] sm:$0xff]
    %v76 = vld [vmem:[%s1 + $0x1a8] sm:$0xff]
    %v77 = vld [vmem:[%s1 + $0x1b0] sm:$0xff]
    %v78 = vld [vmem:[%s1 + $0x1b8] sm:$0xff]
    %v79 = vld [vmem:[%s1 + $0x1c0] sm:$0xff]
    %v80 = vld [vmem:[%s1 + $0x1c8] sm:$0xff]
    %v81 = vld [vmem:[%s1 + $0x1d0] sm:$0xff]
    %v82 = vld [vmem:[%s1 + $0x1d8] sm:$0xff]
    %v83 = vld [vmem:[%s1 + $0x1e0] sm:$0xff]
    %v84 = vld [vmem:[%s1 + $0x1e8] sm:$0xff]
    %v85 = vld [vmem:[%s1 + $0x1f0] sm:$0xff]
    %v86 = vld [vmem:[%s1 + $0x1f8] sm:$0xff]
    %v87 = vld [vmem:[%s1 + $0x200] sm:$0xff]
    %v88 = vld [vmem:[%s1 + $0x208] sm:$0xff]
    %v89 = vld [vmem:[%s1 + $0x210] sm:$0xff]
    %v90 = vld [vmem:[%s1 + $0x218] sm:$0xff]
    %v91 = vld [vmem:[%s1 + $0x220] sm:$0xff]
    %v92 = vld [vmem:[%s1 + $0x228] sm:$0xff]
    %v93 = vld [vmem:[%s1 + $0x230] sm:$0xff]
    %v94 = vld [vmem:[%s1 + $0x238] sm:$0xff]
    %v95 = vld [vmem:[%s1 + $0x240] sm:$0xff]
    %v96 = vld [vmem:[%s1 + $0x248] sm:$0xff]
    %v97 = vld [vmem:[%s1 + $0x250] sm:$0xff]
    %v98 = vld [vmem:[%s1 + $0x258] sm:$0xff]
    %v99 = vld [vmem:[%s1 + $0x260] sm:$0xff]
    %v100 = vld [vmem:[%s1 + $0x268] sm:$0xff]
    %v101 = vld [vmem:[%s1 + $0x270] sm:$0xff]
    %v102 = vld [vmem:[%s1 + $0x278] sm:$0xff]
    %v103 = vld [vmem:[%s1 + $0x280] sm:$0xff]
    %v104 = vld [vmem:[%s1 + $0x288] sm:$0xff]
    %v105 = vld [vmem:[%s1 + $0x290] sm:$0xff]
    %v106 = vld [vmem:[%s1 + $0x298] sm:$0xff]
    %v107 = vld [vmem:[%s1 + $0x2a0] sm:$0xff]
    %v108 = vld [vmem:[%s1 + $0x2a8] sm:$0xff]
    %v109 = vld [vmem:[%s1 + $0x2b0] sm:$0xff]
    %v110 = vld [vmem:[%s1 + $0x2b8] sm:$0xff]
    %v111 = vld [vmem:[%s1 + $0x2c0] sm:$0xff]
    %v112 = vld [vmem:[%s1 + $0x2c8] sm:$0xff]
    %v113 = vld [vmem:[%s1 + $0x2d0] sm:$0xff]
    %v114 = vld [vmem:[%s1 + $0x2d8] sm:$0xff]
    %v115 = vld [vmem:[%s1 + $0x2e0] sm:$0xff]
    %v116 = vld [vmem:[%s1 + $0x2e8] sm:$0xff]
    %v117 = vld [vmem:[%s1 + $0x2f0] sm:$0xff]
    %v118 = vld [vmem:[%s1 + $0x2f8] sm:$0xff]
    %v119 = vld [vmem:[%s1 + $0x300] sm:$0xff]
    %v120 = vld [vmem:[%s1 + $0x308] sm:$0xff]
    %v121 = vld [vmem:[%s1 + $0x310] sm:$0xff]
    %v122 = vld [vmem:[%s1 + $0x318] sm:$0xff]
    %v123 = vld [vmem:[%s1 + $0x320] sm:$0xff]
    %v124 = vld [vmem:[%s1 + $0x328] sm:$0xff]
    %v125 = vld [vmem:[%s1 + $0x330] sm:$0xff]
    %v126 = vld [vmem:[%s1 + $0x338] sm:$0xff]
    %v127 = vld [vmem:[%s1 + $0x340] sm:$0xff]
    %v128 = vld [vmem:[%s1 + $0x348] sm:$0xff]
    %v129 = vld [vmem:[%s1 + $0x350] sm:$0xff]
    %v130 = vld [vmem:[%s1 + $0x358] sm:$0xff]
    %v131 = vld [vmem:[%s1 + $0x360] sm:$0xff]
    %v132 = vld [vmem:[%s1 + $0x368] sm:$0xff]
    %v133 = vld [vmem:[%s1 + $0x370] sm:$0xff]
    %v134 = vld [vmem:[%s1 + $0x378] sm:$0xff]
    %v135 = vld [vmem:[%s1 + $0x380] sm:$0xff]
    %v136 = vld [vmem:[%s1 + $0x388] sm:$0xff]
    %v137 = vld [vmem:[%s1 + $0x390] sm:$0xff]
    %v138 = vld [vmem:[%s1 + $0x398] sm:$0xff]
    %v139 = vld [vmem:[%s1 + $0x3a0] sm:$0xff]
    %v140 = vld [vmem:[%s1 + $0x3a8] sm:$0xff]
    %v141 = vld [vmem:[%s1 + $0x3b0] sm:$0xff]
    %v142 = vld [vmem:[%s1 + $0x3b8] sm:$0xff]
    %v143 = vld [vmem:[%s1 + $0x3c0] sm:$0xff]
    %v144 = vld [vmem:[%s1 + $0x3c8] sm:$0xff]
    %v145 = vld [vmem:[%s1 + $0x3d0] sm:$0xff]
    %v146 = vld [vmem:[%s1 + $0x3d8] sm:$0xff]
    %v147 = vld [vmem:[%s1 + $0x3e0] sm:$0xff]
    %v148 = vld [vmem:[%s1 + $0x3e8] sm:$0xff]
    %v149 = vld [vmem:[%s1 + $0x3f0] sm:$0xff]
    %v150 = vld [vmem:[%s1 + $0x3f8] sm:$0xff]
    %v151 = vld [vmem:[%s4] sm:$0x1]
    %v152 = vlaneseq
    %v153 = vshrl.u32 %v152, 7
    %v154 = vsub.s32 0, %v153
    %v155 = vrot.slane %v151, %v154
    %v158 = vcombine.high %v21, %v21
    %v160 = vunpack.c.l.s4 1983009808
    %v161 = vunpack.c.0.s8 %v160
    %v162 = vlaneseq
    %v163 = vshrl.u32 %v162, 7
    %v164 = vsub.s32 %v161, %v163
    %v165 = vrot.slane %v21, %v164
    %v167 = vunpack.c.l.s4 1983009808
    %v168 = vunpack.c.0.s8 %v167
    %v169 = vlaneseq
    %v170 = vshrl.u32 %v169, 7
    %v171 = vsub.s32 %v168, %v170
    %v172 = vrot.slane %v158, %v171
    %v173 = vcombine.high %v165, %v165
    %v174 = vcombine.high %v172, %v172
    %v175 = vcombine.high %v22, %v22
    %v177 = vunpack.c.l.s4 1983009808
    %v178 = vunpack.c.0.s8 %v177
    %v179 = vlaneseq
    %v180 = vshrl.u32 %v179, 7
    %v181 = vsub.s32 %v178, %v180
    %v182 = vrot.slane %v22, %v181
    %v184 = vunpack.c.l.s4 1983009808
    %v185 = vunpack.c.0.s8 %v184
    %v186 = vlaneseq
    %v187 = vshrl.u32 %v186, 7
    %v188 = vsub.s32 %v185, %v187
    %v189 = vrot.slane %v175, %v188
    %v190 = vcombine.high %v182, %v182
    %v191 = vcombine.high %v189, %v189
    %200 = vmatprep.subr.mxu0 0.0
    %201 = vmatpush1.msra.mxu0 %v23
    %202 = vmatprep.subr.mxu0 0.0
    %203 = vmatpush1.msra.mxu0 %v24
    %204 = vmatprep.subr.mxu0 0.0
    %205 = vmatpush1.msra.mxu0 %v25
    %206 = vmatprep.subr.mxu0 0.0
    %207 = vmatpush1.msra.mxu0 %v26
    %208 = vmatprep.subr.mxu0 0.0
    %209 = vmatpush1.msra.mxu0 %v27
    %210 = vmatprep.subr.mxu0 0.0
    %211 = vmatpush1.msra.mxu0 %v28
    %212 = vmatprep.subr.mxu0 0.0
    %213 = vmatpush1.msra.mxu0 %v29
    %214 = vmatprep.subr.mxu0 0.0
    %215 = vmatpush1.msra.mxu0 %v30
    %216 = vmatprep.subr.mxu0 0.0
    %217 = vmatpush1.msra.mxu0 %v31
    %218 = vmatprep.subr.mxu0 0.0
    %219 = vmatpush1.msra.mxu0 %v32
    %220 = vmatprep.subr.mxu0 0.0
    %221 = vmatpush1.msra.mxu0 %v33
    %222 = vmatprep.subr.mxu0 0.0
    %223 = vmatpush1.msra.mxu0 %v34
    %224 = vmatprep.subr.mxu0 0.0
    %225 = vmatpush1.msra.mxu0 %v35
    %226 = vmatprep.subr.mxu0 0.0
    %227 = vmatpush1.msra.mxu0 %v36
    %228 = vmatprep.subr.mxu0 0.0
    %229 = vmatpush1.msra.mxu0 %v37
    %230 = vmatprep.subr.mxu0 0.0
    %231 = vmatpush1.msra.mxu0 %v38
    %232 = vmatprep.subr.mxu0 0.0
    %233 = vmatpush1.msra.mxu0 %v39
    %234 = vmatprep.subr.mxu0 0.0
    %235 = vmatpush1.msra.mxu0 %v40
    %236 = vmatprep.subr.mxu0 0.0
    %237 = vmatpush1.msra.mxu0 %v41
    %238 = vmatprep.subr.mxu0 0.0
    %239 = vmatpush1.msra.mxu0 %v42
    %240 = vmatprep.subr.mxu0 0.0
    %241 = vmatpush1.msra.mxu0 %v43
    %242 = vmatprep.subr.mxu0 0.0
    %243 = vmatpush1.msra.mxu0 %v44
    %244 = vmatprep.subr.mxu0 0.0
    %245 = vmatpush1.msra.mxu0 %v45
    %246 = vmatprep.subr.mxu0 0.0
    %247 = vmatpush1.msra.mxu0 %v46
    %248 = vmatprep.subr.mxu0 0.0
    %249 = vmatpush1.msra.mxu0 %v47
    %250 = vmatprep.subr.mxu0 0.0
    %251 = vmatpush1.msra.mxu0 %v48
    %252 = vmatprep.subr.mxu0 0.0
    %253 = vmatpush1.msra.mxu0 %v49
    %254 = vmatprep.subr.mxu0 0.0
    %255 = vmatpush1.msra.mxu0 %v50
    %256 = vmatprep.subr.mxu0 0.0
    %257 = vmatpush1.msra.mxu0 %v51
    %258 = vmatprep.subr.mxu0 0.0
    %259 = vmatpush1.msra.mxu0 %v52
    %260 = vmatprep.subr.mxu0 0.0
    %261 = vmatpush1.msra.mxu0 %v53
    %262 = vmatprep.subr.mxu0 0.0
    %263 = vmatpush1.msra.mxu0 %v54
    %264 = vmatprep.mubr.f32.mxu0 %v173
    %265 = vmatmul.mubr.f32.gmra.mrb[0].mxu0 %v165
    %v266 = vpop.f32.mrb[0].mxu0
    %v267 = vadd.f32 %v155, %v266
    %v268 = vpop.f32.mrb[0].mxu0
    %269 = vdwg.mxu0
    %270 = vmatprep.subr.mxu0 0.0
    %271 = vmatpush1.msra.mxu0 %v55
    %272 = vmatprep.subr.mxu0 0.0
    %273 = vmatpush1.msra.mxu0 %v56
    %274 = vmatprep.subr.mxu0 0.0
    %275 = vmatpush1.msra.mxu0 %v57
    %276 = vmatprep.subr.mxu0 0.0
    %277 = vmatpush1.msra.mxu0 %v58
    %278 = vmatprep.subr.mxu0 0.0
    %279 = vmatpush1.msra.mxu0 %v59
    %280 = vmatprep.subr.mxu0 0.0
    %281 = vmatpush1.msra.mxu0 %v60
    %282 = vmatprep.subr.mxu0 0.0
    %283 = vmatpush1.msra.mxu0 %v61
    %284 = vmatprep.subr.mxu0 0.0
    %285 = vmatpush1.msra.mxu0 %v62
    %286 = vmatprep.subr.mxu0 0.0
    %287 = vmatpush1.msra.mxu0 %v63
    %288 = vmatprep.subr.mxu0 0.0
    %289 = vmatpush1.msra.mxu0 %v64
    %290 = vmatprep.subr.mxu0 0.0
    %291 = vmatpush1.msra.mxu0 %v65
    %292 = vmatprep.subr.mxu0 0.0
    %293 = vmatpush1.msra.mxu0 %v66
    %294 = vmatprep.subr.mxu0 0.0
    %295 = vmatpush1.msra.mxu0 %v67
    %296 = vmatprep.subr.mxu0 0.0
    %297 = vmatpush1.msra.mxu0 %v68
    %298 = vmatprep.subr.mxu0 0.0
    %299 = vmatpush1.msra.mxu0 %v69
    %300 = vmatprep.subr.mxu0 0.0
    %301 = vmatpush1.msra.mxu0 %v70
    %302 = vmatprep.subr.mxu0 0.0
    %303 = vmatpush1.msra.mxu0 %v71
    %304 = vmatprep.subr.mxu0 0.0
    %305 = vmatpush1.msra.mxu0 %v72
    %306 = vmatprep.subr.mxu0 0.0
    %307 = vmatpush1.msra.mxu0 %v73
    %308 = vmatprep.subr.mxu0 0.0
    %309 = vmatpush1.msra.mxu0 %v74
    %310 = vmatprep.subr.mxu0 0.0
    %311 = vmatpush1.msra.mxu0 %v75
    %312 = vmatprep.subr.mxu0 0.0
    %313 = vmatpush1.msra.mxu0 %v76
    %314 = vmatprep.subr.mxu0 0.0
    %315 = vmatpush1.msra.mxu0 %v77
    %316 = vmatprep.subr.mxu0 0.0
    %317 = vmatpush1.msra.mxu0 %v78
    %318 = vmatprep.subr.mxu0 0.0
    %319 = vmatpush1.msra.mxu0 %v79
    %320 = vmatprep.subr.mxu0 0.0
    %321 = vmatpush1.msra.mxu0 %v80
    %322 = vmatprep.subr.mxu0 0.0
    %323 = vmatpush1.msra.mxu0 %v81
    %324 = vmatprep.subr.mxu0 0.0
    %325 = vmatpush1.msra.mxu0 %v82
    %326 = vmatprep.subr.mxu0 0.0
    %327 = vmatpush1.msra.mxu0 %v83
    %328 = vmatprep.subr.mxu0 0.0
    %329 = vmatpush1.msra.mxu0 %v84
    %330 = vmatprep.subr.mxu0 0.0
    %331 = vmatpush1.msra.mxu0 %v85
    %332 = vmatprep.subr.mxu0 0.0
    %333 = vmatpush1.msra.mxu0 %v86
    %334 = vmatprep.mubr.f32.mxu0 %v174
    %335 = vmatmul.mubr.f32.gmra.mrb[0].mxu0 %v172
    %v336 = vpop.f32.mrb[0].mxu0
    %v337 = vadd.f32 %v267, %v336
    %v338 = vpop.f32.mrb[0].mxu0
    %339 = vdwg.mxu0
    %340 = vmatprep.subr.mxu0 0.0
    %341 = vmatpush1.msra.mxu0 %v87
    %342 = vmatprep.subr.mxu0 0.0
    %343 = vmatpush1.msra.mxu0 %v88
    %344 = vmatprep.subr.mxu0 0.0
    %345 = vmatpush1.msra.mxu0 %v89
    %346 = vmatprep.subr.mxu0 0.0
    %347 = vmatpush1.msra.mxu0 %v90
    %348 = vmatprep.subr.mxu0 0.0
    %349 = vmatpush1.msra.mxu0 %v91
    %350 = vmatprep.subr.mxu0 0.0
    %351 = vmatpush1.msra.mxu0 %v92
    %352 = vmatprep.subr.mxu0 0.0
    %353 = vmatpush1.msra.mxu0 %v93
    %354 = vmatprep.subr.mxu0 0.0
    %355 = vmatpush1.msra.mxu0 %v94
    %356 = vmatprep.subr.mxu0 0.0
    %357 = vmatpush1.msra.mxu0 %v95
    %358 = vmatprep.subr.mxu0 0.0
    %359 = vmatpush1.msra.mxu0 %v96
    %360 = vmatprep.subr.mxu0 0.0
    %361 = vmatpush1.msra.mxu0 %v97
    %362 = vmatprep.subr.mxu0 0.0
    %363 = vmatpush1.msra.mxu0 %v98
    %364 = vmatprep.subr.mxu0 0.0
    %365 = vmatpush1.msra.mxu0 %v99
    %366 = vmatprep.subr.mxu0 0.0
    %367 = vmatpush1.msra.mxu0 %v100
    %368 = vmatprep.subr.mxu0 0.0
    %369 = vmatpush1.msra.mxu0 %v101
    %370 = vmatprep.subr.mxu0 0.0
    %371 = vmatpush1.msra.mxu0 %v102
    %372 = vmatprep.subr.mxu0 0.0
    %373 = vmatpush1.msra.mxu0 %v103
    %374 = vmatprep.subr.mxu0 0.0
    %375 = vmatpush1.msra.mxu0 %v104
    %376 = vmatprep.subr.mxu0 0.0
    %377 = vmatpush1.msra.mxu0 %v105
    %378 = vmatprep.subr.mxu0 0.0
    %379 = vmatpush1.msra.mxu0 %v106
    %380 = vmatprep.subr.mxu0 0.0
    %381 = vmatpush1.msra.mxu0 %v107
    %382 = vmatprep.subr.mxu0 0.0
    %383 = vmatpush1.msra.mxu0 %v108
    %384 = vmatprep.subr.mxu0 0.0
    %385 = vmatpush1.msra.mxu0 %v109
    %386 = vmatprep.subr.mxu0 0.0
    %387 = vmatpush1.msra.mxu0 %v110
    %388 = vmatprep.subr.mxu0 0.0
    %389 = vmatpush1.msra.mxu0 %v111
    %390 = vmatprep.subr.mxu0 0.0
    %391 = vmatpush1.msra.mxu0 %v112
    %392 = vmatprep.subr.mxu0 0.0
    %393 = vmatpush1.msra.mxu0 %v113
    %394 = vmatprep.subr.mxu0 0.0
    %395 = vmatpush1.msra.mxu0 %v114
    %396 = vmatprep.subr.mxu0 0.0
    %397 = vmatpush1.msra.mxu0 %v115
    %398 = vmatprep.subr.mxu0 0.0
    %399 = vmatpush1.msra.mxu0 %v116
    %400 = vmatprep.subr.mxu0 0.0
    %401 = vmatpush1.msra.mxu0 %v117
    %402 = vmatprep.subr.mxu0 0.0
    %403 = vmatpush1.msra.mxu0 %v118
    %404 = vmatprep.mubr.f32.mxu0 %v190
    %405 = vmatmul.mubr.f32.gmra.mrb[0].mxu0 %v182
    %v406 = vpop.f32.mrb[0].mxu0
    %v407 = vadd.f32 %v337, %v406
    %v408 = vpop.f32.mrb[0].mxu0
    %409 = vdwg.mxu0
    %410 = vmatprep.subr.mxu0 0.0
    %411 = vmatpush1.msra.mxu0 %v119
    %412 = vmatprep.subr.mxu0 0.0
    %413 = vmatpush1.msra.mxu0 %v120
    %414 = vmatprep.subr.mxu0 0.0
    %415 = vmatpush1.msra.mxu0 %v121
    %416 = vmatprep.subr.mxu0 0.0
    %417 = vmatpush1.msra.mxu0 %v122
    %418 = vmatprep.subr.mxu0 0.0
    %419 = vmatpush1.msra.mxu0 %v123
    %420 = vmatprep.subr.mxu0 0.0
    %421 = vmatpush1.msra.mxu0 %v124
    %422 = vmatprep.subr.mxu0 0.0
    %423 = vmatpush1.msra.mxu0 %v125
    %424 = vmatprep.subr.mxu0 0.0
    %425 = vmatpush1.msra.mxu0 %v126
    %426 = vmatprep.subr.mxu0 0.0
    %427 = vmatpush1.msra.mxu0 %v127
    %428 = vmatprep.subr.mxu0 0.0
    %429 = vmatpush1.msra.mxu0 %v128
    %430 = vmatprep.subr.mxu0 0.0
    %431 = vmatpush1.msra.mxu0 %v129
    %432 = vmatprep.subr.mxu0 0.0
    %433 = vmatpush1.msra.mxu0 %v130
    %434 = vmatprep.subr.mxu0 0.0
    %435 = vmatpush1.msra.mxu0 %v131
    %436 = vmatprep.subr.mxu0 0.0
    %437 = vmatpush1.msra.mxu0 %v132
    %438 = vmatprep.subr.mxu0 0.0
    %439 = vmatpush1.msra.mxu0 %v133
    %440 = vmatprep.subr.mxu0 0.0
    %441 = vmatpush1.msra.mxu0 %v134
    %442 = vmatprep.subr.mxu0 0.0
    %443 = vmatpush1.msra.mxu0 %v135
    %444 = vmatprep.subr.mxu0 0.0
    %445 = vmatpush1.msra.mxu0 %v136
    %446 = vmatprep.subr.mxu0 0.0
    %447 = vmatpush1.msra.mxu0 %v137
    %448 = vmatprep.subr.mxu0 0.0
    %449 = vmatpush1.msra.mxu0 %v138
    %450 = vmatprep.subr.mxu0 0.0
    %451 = vmatpush1.msra.mxu0 %v139
    %452 = vmatprep.subr.mxu0 0.0
    %453 = vmatpush1.msra.mxu0 %v140
    %454 = vmatprep.subr.mxu0 0.0
    %455 = vmatpush1.msra.mxu0 %v141
    %456 = vmatprep.subr.mxu0 0.0
    %457 = vmatpush1.msra.mxu0 %v142
    %458 = vmatprep.subr.mxu0 0.0
    %459 = vmatpush1.msra.mxu0 %v143
    %460 = vmatprep.subr.mxu0 0.0
    %461 = vmatpush1.msra.mxu0 %v144
    %462 = vmatprep.subr.mxu0 0.0
    %463 = vmatpush1.msra.mxu0 %v145
    %464 = vmatprep.subr.mxu0 0.0
    %465 = vmatpush1.msra.mxu0 %v146
    %466 = vmatprep.subr.mxu0 0.0
    %467 = vmatpush1.msra.mxu0 %v147
    %468 = vmatprep.subr.mxu0 0.0
    %469 = vmatpush1.msra.mxu0 %v148
    %470 = vmatprep.subr.mxu0 0.0
    %471 = vmatpush1.msra.mxu0 %v149
    %472 = vmatprep.subr.mxu0 0.0
    %473 = vmatpush1.msra.mxu0 %v150
    %474 = vmatprep.mubr.f32.mxu0 %v191
    %475 = vmatmul.mubr.f32.gmra.mrb[0].mxu0 %v189
    %v476 = vpop.f32.mrb[0].mxu0
    %v477 = vadd.f32 %v407, %v476
    %v478 = vpop.f32.mrb[0].mxu0
    %479 = vdwg.mxu0
    %v480 = vmax.f32 %v477, 0.0
    %v481 = vld [vmem:[%s2] sm:$0xff]
    %v482 = vld [vmem:[%s2 + $0x8] sm:$0xff]
    %v483 = vld [vmem:[%s2 + $0x10] sm:$0xff]
    %v484 = vld [vmem:[%s2 + $0x18] sm:$0xff]
    %v485 = vld [vmem:[%s4 + $0x1] sm:$0x1]
    %v486 = vlaneseq
    %v487 = vshrl.u32 %v486, 7
    %v488 = vsub.s32 0, %v487
    %v489 = vrot.slane %v485, %v488
    %vm490 = vcmask 261120
    %v492 = vsel %vm490, %v480, 0
    %494 = vmatprep.subr.mxu0 0.0
    %495 = vmatpush1.msra.mxu0 %v481
    %496 = vmatprep.subr.mxu0 0.0
    %497 = vmatpush1.msra.mxu0 %v482
    %498 = vmatprep.subr.mxu0 0.0
    %499 = vmatpush1.msra.mxu0 %v483
    %500 = vmatprep.subr.mxu0 0.0
    %501 = vmatpush1.msra.mxu0 %v484
    %502 = vmatprep.subr.mxu0 0.0
    %503 = vmatpush1.msra.mxu0 0.0
    %504 = vmatprep.subr.mxu0 0.0
    %505 = vmatpush1.msra.mxu0 0.0
    %506 = vmatprep.subr.mxu0 0.0
    %507 = vmatpush1.msra.mxu0 0.0
    %508 = vmatprep.subr.mxu0 0.0
    %509 = vmatpush1.msra.mxu0 0.0
    %510 = vmatprep.subr.mxu0 0.0
    %511 = vmatpush1.msra.mxu0 0.0
    %512 = vmatprep.subr.mxu0 0.0
    %513 = vmatpush1.msra.mxu0 0.0
    %514 = vmatprep.subr.mxu0 0.0
    %515 = vmatpush1.msra.mxu0 0.0
    %516 = vmatprep.subr.mxu0 0.0
    %517 = vmatpush1.msra.mxu0 0.0
    %518 = vmatprep.subr.mxu0 0.0
    %519 = vmatpush1.msra.mxu0 0.0
    %520 = vmatprep.subr.mxu0 0.0
    %521 = vmatpush1.msra.mxu0 0.0
    %522 = vmatprep.subr.mxu0 0.0
    %523 = vmatpush1.msra.mxu0 0.0
    %524 = vmatprep.subr.mxu0 0.0
    %525 = vmatpush1.msra.mxu0 0.0
    %526 = vmatprep.subr.mxu0 0.0
    %527 = vmatpush1.msra.mxu0 0.0
    %528 = vmatprep.subr.mxu0 0.0
    %529 = vmatpush1.msra.mxu0 0.0
    %530 = vmatprep.subr.mxu0 0.0
    %531 = vmatpush1.msra.mxu0 0.0
    %532 = vmatprep.subr.mxu0 0.0
    %533 = vmatpush1.msra.mxu0 0.0
    %534 = vmatprep.subr.mxu0 0.0
    %535 = vmatpush1.msra.mxu0 0.0
    %536 = vmatprep.subr.mxu0 0.0
    %537 = vmatpush1.msra.mxu0 0.0
    %538 = vmatprep.subr.mxu0 0.0
    %539 = vmatpush1.msra.mxu0 0.0
    %540 = vmatprep.subr.mxu0 0.0
    %541 = vmatpush1.msra.mxu0 0.0
    %542 = vmatprep.subr.mxu0 0.0
    %543 = vmatpush1.msra.mxu0 0.0
    %544 = vmatprep.subr.mxu0 0.0
    %545 = vmatpush1.msra.mxu0 0.0
    %546 = vmatprep.subr.mxu0 0.0
    %547 = vmatpush1.msra.mxu0 0.0
    %548 = vmatprep.subr.mxu0 0.0
    %549 = vmatpush1.msra.mxu0 0.0
    %550 = vmatprep.subr.mxu0 0.0
    %551 = vmatpush1.msra.mxu0 0.0
    %552 = vmatprep.subr.mxu0 0.0
    %553 = vmatpush1.msra.mxu0 0.0
    %554 = vmatprep.subr.mxu0 0.0
    %555 = vmatpush1.msra.mxu0 0.0
    %556 = vmatprep.subr.mxu0 0.0
    %557 = vmatpush1.msra.mxu0 0.0
    %558 = vmatprep.mubr.f32.mxu0 0.0
    %559 = vmatmul.mubr.f32.gmra.mrb[0].mxu0 %v492
    %v560 = vpop.f32.mrb[0].mxu0
    %v561 = vadd.f32 %v489, %v560
    %v562 = vpop.f32.mrb[0].mxu0
    %563 = vdwg.mxu0
    %v564 = vmax.f32 %v561, 0.0
    %v565 = vld [vmem:[%s3] sm:$0xff]
    %v566 = vld [vmem:[%s3 + $0x8] sm:$0xff]
    %v567 = vld [vmem:[%s3 + $0x10] sm:$0xff]
    %v568 = vld [vmem:[%s3 + $0x18] sm:$0xff]
    %v569 = vld [vmem:[%s4 + $0x2] sm:$0x1]
    %v570 = vlaneseq
    %v571 = vshrl.u32 %v570, 7
    %v572 = vsub.s32 0, %v571
    %v573 = vrot.slane %v569, %v572
    %v575 = vsel %vm490, %v564, 0
    %577 = vmatprep.subr.mxu0 0.0
    %578 = vmatpush1.msra.mxu0 %v565
    %579 = vmatprep.subr.mxu0 0.0
    %580 = vmatpush1.msra.mxu0 %v566
    %581 = vmatprep.subr.mxu0 0.0
    %582 = vmatpush1.msra.mxu0 %v567
    %583 = vmatprep.subr.mxu0 0.0
    %584 = vmatpush1.msra.mxu0 %v568
    %585 = vmatprep.subr.mxu0 0.0
    %586 = vmatpush1.msra.mxu0 0.0
    %587 = vmatprep.subr.mxu0 0.0
    %588 = vmatpush1.msra.mxu0 0.0
    %589 = vmatprep.subr.mxu0 0.0
    %590 = vmatpush1.msra.mxu0 0.0
    %591 = vmatprep.subr.mxu0 0.0
    %592 = vmatpush1.msra.mxu0 0.0
    %593 = vmatprep.subr.mxu0 0.0
    %594 = vmatpush1.msra.mxu0 0.0
    %595 = vmatprep.subr.mxu0 0.0
    %596 = vmatpush1.msra.mxu0 0.0
    %597 = vmatprep.subr.mxu0 0.0
    %598 = vmatpush1.msra.mxu0 0.0
    %599 = vmatprep.subr.mxu0 0.0
    %600 = vmatpush1.msra.mxu0 0.0
    %601 = vmatprep.subr.mxu0 0.0
    %602 = vmatpush1.msra.mxu0 0.0
    %603 = vmatprep.subr.mxu0 0.0
    %604 = vmatpush1.msra.mxu0 0.0
    %605 = vmatprep.subr.mxu0 0.0
    %606 = vmatpush1.msra.mxu0 0.0
    %607 = vmatprep.subr.mxu0 0.0
    %608 = vmatpush1.msra.mxu0 0.0
    %609 = vmatprep.subr.mxu0 0.0
    %610 = vmatpush1.msra.mxu0 0.0
    %611 = vmatprep.subr.mxu0 0.0
    %612 = vmatpush1.msra.mxu0 0.0
    %613 = vmatprep.subr.mxu0 0.0
    %614 = vmatpush1.msra.mxu0 0.0
    %615 = vmatprep.subr.mxu0 0.0
    %616 = vmatpush1.msra.mxu0 0.0
    %617 = vmatprep.subr.mxu0 0.0
    %618 = vmatpush1.msra.mxu0 0.0
    %619 = vmatprep.subr.mxu0 0.0
    %620 = vmatpush1.msra.mxu0 0.0
    %621 = vmatprep.subr.mxu0 0.0
    %622 = vmatpush1.msra.mxu0 0.0
    %623 = vmatprep.subr.mxu0 0.0
    %624 = vmatpush1.msra.mxu0 0.0
    %625 = vmatprep.subr.mxu0 0.0
    %626 = vmatpush1.msra.mxu0 0.0
    %627 = vmatprep.subr.mxu0 0.0
    %628 = vmatpush1.msra.mxu0 0.0
    %629 = vmatprep.subr.mxu0 0.0
    %630 = vmatpush1.msra.mxu0 0.0
    %631 = vmatprep.subr.mxu0 0.0
    %632 = vmatpush1.msra.mxu0 0.0
    %633 = vmatprep.subr.mxu0 0.0
    %634 = vmatpush1.msra.mxu0 0.0
    %635 = vmatprep.subr.mxu0 0.0
    %636 = vmatpush1.msra.mxu0 0.0
    %637 = vmatprep.subr.mxu0 0.0
    %638 = vmatpush1.msra.mxu0 0.0
    %639 = vmatprep.subr.mxu0 0.0
    %640 = vmatpush1.msra.mxu0 0.0
    %641 = vmatprep.mubr.f32.mxu0 0.0
    %642 = vmatmul.mubr.f32.gmra.mrb[0].mxu0 %v575
    %v643 = vpop.f32.mrb[0].mxu0
    %v644 = vadd.f32 %v573, %v643
    %v645 = vpop.f32.mrb[0].mxu0
    %646 = vdwg.mxu0
    %647 = vst [vmem:[#allocation2] sm:$0x3] %v644
    // Predicated region
    $region22: #{mlp_forward.1} parent=1 // pred_check
      _
    $region23: #{mlp_forward.1} parent=1 // pred_check_branch
      %649 = sbr.rel (0) target = $region25
    $region24: #{mlp_forward.1} parent=1 // pred_region
      %s651 = ssub.s32 32, 32
      %652 = vsyncadd [#allocation3], %s651
      %s654 = sshll.u32 [#allocation2], 4
      %s655 = int_to_ptr.vmem [resolvable:$true] %s654
      %657 = dma.vmem_to_hbm [thread:$0]  %s655, 32, %s5, [#allocation3]
    $region25: #{mlp_forward.1} parent=1 // pred_fallthru
      _
    // Predicated region
    $region26: #{mlp_forward.1} parent=1 // pred_check
      _
    $region27: #{mlp_forward.1} parent=1 // pred_check_branch
      %659 = sbr.rel (0) target = $region29
    $region28: #{mlp_forward.1} parent=1 // pred_region
      %660 = dma.done [#allocation3], 32
    $region29: #{mlp_forward.1} parent=1 // pred_fallthru
      _
    %661 = vsyncpa [#allocation3], 1

</llo_original>
